<compile_context>
chip_gen: v7x
topology: tpu7x:2x2x1
jax: 0.10.0
libtpu: 0.0.40
codegen_flags: <defaults>
</compile_context>

<pallas_src>
from functools import partial

import jax
import jax.numpy as jnp
from jax import lax
from jax.experimental import pallas as pl
from jax.experimental.pallas import tpu as pltpu

_LANE_WIDTH = 1024   # lane-dense last dim (multiple of 128)
_ROW_TILE = 512      # rows per grid step (multiple of 8); 512x1024 f32 = 2 MiB/stream


def _crm_kernel(re_ref, im_ref, out_re_ref, out_im_ref):
    re = re_ref[...]
    im = im_ref[...]
    sq = re * re + im * im
    inv_mag = lax.rsqrt(sq)                      # 1 / |z|   (EUP)
    mag = sq * inv_mag                           # |z| = sq * rsqrt(sq)
    scale = jax.nn.sigmoid(mag) * inv_mag        # sigmoid(|z|) / |z|
    out_re_ref[...] = scale * re
    out_im_ref[...] = scale * im


@jax.jit
def complex_ratio_mask(x_re: jax.Array, x_im: jax.Array):
    """Applies the complex ratio mask elementwise.

    Args:
      x_re, x_im: real/imag parts, any shape, same float dtype.
    Returns:
      (out_re, out_im) with the same shape/dtype.
    """
    assert x_re.shape == x_im.shape and x_re.dtype == x_im.dtype
    orig_shape = x_re.shape
    total = x_re.size

    # Lane-dense slab width: wide for large tensors, minimal (128) for tiny ones.
    lane_w = _LANE_WIDTH if total >= _LANE_WIDTH else 128
    padded_total = pl.cdiv(total, lane_w) * lane_w

    re_flat = x_re.reshape(-1)
    im_flat = x_im.reshape(-1)
    if padded_total != total:
        pad = padded_total - total
        re_flat = jnp.pad(re_flat, (0, pad))
        im_flat = jnp.pad(im_flat, (0, pad))

    rows = padded_total // lane_w
    # Full-extent block when the slab is small; otherwise fixed 512-row tiles
    # (last block, if partial, is handled by Pallas bounds masking).
    row_tile = _ROW_TILE if rows > _ROW_TILE else rows
    grid = (pl.cdiv(rows, row_tile),)

    re2d = re_flat.reshape(rows, lane_w)
    im2d = im_flat.reshape(rows, lane_w)

    block = pl.BlockSpec((row_tile, lane_w), lambda i: (i, 0))

    out_re2d, out_im2d = pl.pallas_call(
        _crm_kernel,
        out_shape=(
            jax.ShapeDtypeStruct((rows, lane_w), x_re.dtype),
            jax.ShapeDtypeStruct((rows, lane_w), x_im.dtype),
        ),
        grid_spec=pl.GridSpec(
            grid=grid,
            in_specs=[block, block],
            out_specs=(block, block),
        ),
        compiler_params=pltpu.CompilerParams(
            dimension_semantics=("parallel",),
        ),
    )(re2d, im2d)

    out_re = out_re2d.reshape(-1)[:total].reshape(orig_shape)
    out_im = out_im2d.reshape(-1)[:total].reshape(orig_shape)
    return out_re, out_im


if __name__ == "__main__":
    key = jax.random.PRNGKey(0)
    k_re, k_im = jax.random.split(key)
    B, C, H, W = 2, 4, 16, 16
    x_re = jax.random.normal(k_re, (B, C, H, W), dtype=jnp.float32)
    x_im = jax.random.normal(k_im, (B, C, H, W), dtype=jnp.float32)

    out_re, out_im = complex_ratio_mask(x_re, x_im)
    jax.block_until_ready((out_re, out_im))

    # Reference check in plain JAX (complex arithmetic).
    z = x_re + 1j * x_im
    mag = jnp.abs(z)
    ref = jax.nn.sigmoid(mag) * (z / mag)
    assert out_re.shape == x_re.shape and out_im.shape == x_im.shape
    assert jnp.allclose(out_re, jnp.real(ref), atol=1e-5, rtol=1e-5)
    assert jnp.allclose(out_im, jnp.imag(ref), atol=1e-5, rtol=1e-5)

    print("KERNEL_OK")
</pallas_src>

<mosaic_0001>
module attributes {stable_mosaic.version = 11 : i64} {
  func.func @_crm_kernel(%arg0: i32, %arg1: memref<2x1024xf32, #tpu.memory_space<vmem>>, %arg2: memref<2x1024xf32, #tpu.memory_space<vmem>>, %arg3: memref<2x1024xf32, #tpu.memory_space<vmem>>, %arg4: memref<2x1024xf32, #tpu.memory_space<vmem>>) attributes {dimension_semantics = [#tpu.dimension_semantics<parallel>], iteration_bounds = array<i64: 1>, scalar_prefetch = 0 : i64, scratch_operands = 0 : i64, tpu.core_type = #tpu.core_type<tc>, window_params = [{transform_indices = @transform_0, window_bounds = array<i64: 2, 1024>}, {transform_indices = @transform_1, window_bounds = array<i64: 2, 1024>}, {transform_indices = @transform_2, window_bounds = array<i64: 2, 1024>}, {transform_indices = @transform_3, window_bounds = array<i64: 2, 1024>}]} {
    %c0 = arith.constant 0 : index
    %c0_0 = arith.constant 0 : index
    %0 = vector.load %arg1[%c0, %c0_0] : memref<2x1024xf32, #tpu.memory_space<vmem>>, vector<2x1024xf32>
    %c0_1 = arith.constant 0 : index
    %c0_2 = arith.constant 0 : index
    %1 = vector.load %arg2[%c0_1, %c0_2] : memref<2x1024xf32, #tpu.memory_space<vmem>>, vector<2x1024xf32>
    %2 = arith.mulf %0, %0 : vector<2x1024xf32>
    %3 = arith.mulf %1, %1 : vector<2x1024xf32>
    %4 = arith.addf %2, %3 : vector<2x1024xf32>
    %5 = math.rsqrt %4 : vector<2x1024xf32>
    %6 = arith.mulf %4, %5 : vector<2x1024xf32>
    %7 = arith.negf %6 : vector<2x1024xf32>
    %8 = math.exp %7 : vector<2x1024xf32>
    %cst = arith.constant 1.000000e+00 : f32
    %9 = vector.broadcast %cst : f32 to vector<2x1024xf32>
    %10 = arith.addf %9, %8 : vector<2x1024xf32>
    %11 = arith.divf %9, %10 : vector<2x1024xf32>
    %12 = arith.mulf %11, %5 : vector<2x1024xf32>
    %13 = arith.mulf %12, %0 : vector<2x1024xf32>
    %c0_3 = arith.constant 0 : index
    %c0_4 = arith.constant 0 : index
    %14 = vector.load %arg3[%c0_3, %c0_4] : memref<2x1024xf32, #tpu.memory_space<vmem>>, vector<2x1024xf32>
    tpu.vector_store %arg3[%c0_3, %c0_4], %13 {strides = array<i32>} : memref<2x1024xf32, #tpu.memory_space<vmem>>, vector<2x1024xf32>,
    %15 = arith.mulf %12, %1 : vector<2x1024xf32>
    %c0_5 = arith.constant 0 : index
    %c0_6 = arith.constant 0 : index
    %16 = vector.load %arg4[%c0_5, %c0_6] : memref<2x1024xf32, #tpu.memory_space<vmem>>, vector<2x1024xf32>
    tpu.vector_store %arg4[%c0_5, %c0_6], %15 {strides = array<i32>} : memref<2x1024xf32, #tpu.memory_space<vmem>>, vector<2x1024xf32>,
    return
  }
  func.func @transform_0(%arg0: i32) -> (i32, i32) {
    %c0_i32 = arith.constant 0 : i32
    %c0_i32_0 = arith.constant 0 : i32
    return %arg0, %c0_i32 : i32, i32
  }
  func.func @transform_1(%arg0: i32) -> (i32, i32) {
    %c0_i32 = arith.constant 0 : i32
    %c0_i32_0 = arith.constant 0 : i32
    return %arg0, %c0_i32 : i32, i32
  }
  func.func @transform_2(%arg0: i32) -> (i32, i32) {
    %c0_i32 = arith.constant 0 : i32
    %c0_i32_0 = arith.constant 0 : i32
    return %arg0, %c0_i32 : i32, i32
  }
  func.func @transform_3(%arg0: i32) -> (i32, i32) {
    %c0_i32 = arith.constant 0 : i32
    %c0_i32_0 = arith.constant 0 : i32
    return %arg0, %c0_i32 : i32, i32
  }
}

</mosaic_0001>

<llo_original>
// kernel: complex_ratio_mask.1
$region0: #{complex_ratio_mask.1}
  #allocation0 [shape = 'u32[]', space=smem, size = 0x4, offset = 0x4, fixed_abs, tag = 'smem constant byte address 0x4 - core index']
  #allocation1 [shape = 'u32[144,128]{1,0:T(1,128)}', space=vmem, size = 0x12000, scoped, tag = 'internal scratch']
  %s0 = inlined_call_operand.vmem [shape: f32[2,1024], index: 0, kind: input, shape index: {}]
  %s1 = inlined_call_operand.vmem [shape: f32[2,1024], index: 1, kind: input, shape index: {}]
  %s2 = inlined_call_operand.vmem [shape: f32[2,1024], index: 2, kind: output, shape index: {0}]
  %s3 = inlined_call_operand.vmem [shape: f32[2,1024], index: 3, kind: output, shape index: {1}]
  %4 = xla_tuple %s2, %s3
  %s5 = sld [smem:[#allocation0]]
  $region26: #{complex_ratio_mask.1} parent=0
    _
  %s7 = ssub.s32 1, %s5
  %s8 = scalar_select 0, %s7, %s5
  // Predicated region
  $region2: #{complex_ratio_mask.1} parent=0 // pred_check
    _
  $region3: #{complex_ratio_mask.1} parent=0 // pred_check_branch
    %10 = sbr.rel (0) target = $region5
  $region4: #{complex_ratio_mask.1} parent=0 // pred_region
    _
  $region5: #{complex_ratio_mask.1} parent=0 // pred_fallthru
    _
  // Predicated region
  $region6: #{complex_ratio_mask.1} parent=0 // pred_check
    _
  $region7: #{complex_ratio_mask.1} parent=0 // pred_check_branch
    %12 = sbr.rel (0) target = $region9
  $region8: #{complex_ratio_mask.1} parent=0 // pred_region
    _
  $region9: #{complex_ratio_mask.1} parent=0 // pred_fallthru
    _
  %v13 = vld [vmem:[%s0] sm:$0xff]
  %v14 = vld [vmem:[%s0 + $0x8] sm:$0xff]
  %v15 = vld [vmem:[%s1] sm:$0xff]
  %v16 = vld [vmem:[%s1 + $0x8] sm:$0xff]
  %v17 = vmul.f32 %v13, %v13
  %v18 = vmul.f32 %v14, %v14
  %v19 = vmul.f32 %v15, %v15
  %v20 = vmul.f32 %v16, %v16
  %v21 = vadd.f32 %v17, %v19
  %v22 = vadd.f32 %v18, %v20
  %v23 = vrsqrt.pop %v21
  %v24 = vrsqrt.pop %v22
  %v25 = vmul.f32 %v21, %v23
  %v26 = vmul.f32 %v22, %v24
  %v27 = vxor.u32 %v25, 2147483648
  %v28 = vxor.u32 %v26, 2147483648
  %v29 = vmul.f32 %v27, 1.442695
  %v30 = vpow.pop %v29
  %v31 = vmul.f32 %v28, 1.442695
  %v32 = vpow.pop %v31
  %v33 = vadd.f32 %v30, 1.0
  %v34 = vadd.f32 %v32, 1.0
  %v35 = vrcp.pop %v33
  %v36 = vmul.f32 1.0, %v35
  %v37 = vrcp.pop %v34
  %v38 = vmul.f32 1.0, %v37
  %v39 = vmul.f32 %v36, %v23
  %v40 = vmul.f32 %v38, %v24
  %v41 = vmul.f32 %v39, %v13
  %v42 = vmul.f32 %v40, %v14
  %43 = vst [vmem:[%s2] sm:$0xff] %v41
  %44 = vst [vmem:[%s2 + $0x8] sm:$0xff] %v42
  %v45 = vmul.f32 %v39, %v15
  %v46 = vmul.f32 %v40, %v16
  %47 = vst [vmem:[%s3] sm:$0xff] %v45
  %48 = vst [vmem:[%s3 + $0x8] sm:$0xff] %v46
  // Predicated region
  $region10: #{complex_ratio_mask.1} parent=0 // pred_check
    _
  $region11: #{complex_ratio_mask.1} parent=0 // pred_check_branch
    %50 = sbr.rel (0) target = $region13
  $region12: #{complex_ratio_mask.1} parent=0 // pred_region
    _
  $region13: #{complex_ratio_mask.1} parent=0 // pred_fallthru
    _
  // Predicated region
  $region14: #{complex_ratio_mask.1} parent=0 // pred_check
    _
  $region15: #{complex_ratio_mask.1} parent=0 // pred_check_branch
    %52 = sbr.rel (0) target = $region17
  $region16: #{complex_ratio_mask.1} parent=0 // pred_region
    _
  $region17: #{complex_ratio_mask.1} parent=0 // pred_fallthru
    _
  // Predicated region
  $region18: #{complex_ratio_mask.1} parent=0 // pred_check
    _
  $region19: #{complex_ratio_mask.1} parent=0 // pred_check_branch
    %54 = sbr.rel (0) target = $region21
  $region20: #{complex_ratio_mask.1} parent=0 // pred_region
    _
  $region21: #{complex_ratio_mask.1} parent=0 // pred_fallthru
    _
  // Predicated region
  $region22: #{complex_ratio_mask.1} parent=0 // pred_check
    _
  $region23: #{complex_ratio_mask.1} parent=0 // pred_check_branch
    %56 = sbr.rel (0) target = $region25
  $region24: #{complex_ratio_mask.1} parent=0 // pred_region
    _
  $region25: #{complex_ratio_mask.1} parent=0 // pred_fallthru
    _

</llo_original>
